<compile_context>
chip_gen: v7x
topology: tpu7x:2x2x1
jax: 0.10.0
libtpu: 0.0.40
codegen_flags: <defaults>
</compile_context>

<pallas_src>
import functools

import jax
import jax.numpy as jnp
from jax import lax
from jax.experimental import pallas as pl
from jax.experimental.pallas import tpu as pltpu


def _make_fused_kernel(p_total, eps):
    """Fused conv(+bias) -> batch-stats -> BN scale/shift -> ReLU kernel."""
    inv_count = 1.0 / float(p_total)

    def kernel(patch_ref, w_ref, bias_ref, gamma_ref, beta_ref,
               out_ref, conv_ref, stat_ref):
        # patch_ref : (tp, k_pad)       bf16  -- im2col rows for this block
        # w_ref     : (k_pad, c_pad)    bf16  -- resident across all grid steps
        # bias/gamma/beta_ref : (1, c_pad) f32 -- resident
        # out_ref   : (tp, c_pad)       f32   -- lane-dense output block
        # conv_ref  : (nb, tp, c_pad)   f32 VMEM scratch -- conv output, all blocks
        # stat_ref  : (2, c_pad)        f32 VMEM scratch -- [sum; sumsq] -> [scale; shift]
        phase = pl.program_id(0)
        blk = pl.program_id(1)

        @pl.when(phase == 0)
        def _conv_phase():
            @pl.when(blk == 0)
            def _init_stats():
                stat_ref[...] = jnp.zeros_like(stat_ref)

            # One large-K matmul (bf16 operands, f32 accumulation on the MXU).
            acc = jnp.dot(patch_ref[...], w_ref[...],
                          preferred_element_type=jnp.float32)
            acc = acc + bias_ref[...]
            conv_ref[blk] = acc
            # Packed per-channel partial statistics (sublane reductions -> XLU).
            stat_ref[0:1, :] = stat_ref[0:1, :] + jnp.sum(acc, axis=0, keepdims=True)
            stat_ref[1:2, :] = stat_ref[1:2, :] + jnp.sum(acc * acc, axis=0,
                                                          keepdims=True)

        @pl.when(phase == 1)
        def _bn_relu_phase():
            @pl.when(blk == 0)
            def _fold_stats():
                # Train-mode BatchNorm: biased variance over (N, H, W).
                # NOTE: E[x^2]-mean^2 in f32; fine at the required ~1e-2 tolerance.
                mean = stat_ref[0:1, :] * inv_count
                ex2 = stat_ref[1:2, :] * inv_count
                var = jnp.maximum(ex2 - mean * mean, 0.0)
                inv_std = lax.rsqrt(var + eps)
                scale = gamma_ref[...] * inv_std
                shift = beta_ref[...] - mean * scale
                stat_ref[0:1, :] = scale
                stat_ref[1:2, :] = shift

            y = conv_ref[blk]
            out_ref[...] = jnp.maximum(y * stat_ref[0:1, :] + stat_ref[1:2, :], 0.0)

    return kernel


def _row_tile(p_total, target=256):
    """Largest multiple-of-8 divisor of p_total that is <= target (or p_total)."""
    if p_total <= target:
        return p_total
    for t in range(target, 0, -8):
        if t % 8 == 0 and p_total % t == 0:
            return t
    return p_total


@functools.partial(jax.jit, static_argnames=("eps",))
def conv_block(x_nchw, weight, bias, gamma, beta, *, eps=1e-5):
    """Forward of ConvBlock. x_nchw: (N, C_in, H, W). weight: (C_out, C_in, kh, kw)."""
    n, c_in, h, w = x_nchw.shape
    c_out, _, kh, kw = weight.shape
    ph, pw = kh // 2, kw // 2
    c_pad = ((c_out + 127) // 128) * 128          # lane-dense output channels
    kdim = kh * kw * c_in
    k_pad = ((kdim + 127) // 128) * 128           # lane-dense contraction dim
    p_total = n * h * w

    # --- Wrapper-side prep (tiny, bf16 end-to-end). ----------------------------------
    # im2col patches: (N*H*W, kh*kw*C_in), feature index = (dy*kw+dx)*C_in + c.
    x_nhwc = jnp.transpose(x_nchw, (0, 2, 3, 1)).astype(jnp.bfloat16)
    xp = jnp.pad(x_nhwc, ((0, 0), (ph, ph), (pw, pw), (0, 0)))
    taps = [xp[:, dy:dy + h, dx:dx + w, :] for dy in range(kh) for dx in range(kw)]
    patches = jnp.stack(taps, axis=3).reshape(p_total, kdim)
    patches = jnp.pad(patches, ((0, 0), (0, k_pad - kdim)))          # zero K padding

    # Weights: (C_out, C_in, kh, kw) -> (kh*kw*C_in, c_pad), matching patch ordering.
    w_mat = jnp.transpose(weight, (2, 3, 1, 0)).reshape(kdim, c_out)
    w_mat = jnp.pad(w_mat, ((0, k_pad - kdim), (0, c_pad - c_out))).astype(jnp.bfloat16)

    def _pad_vec(v):
        return jnp.pad(v.astype(jnp.float32), (0, c_pad - c_out)).reshape(1, c_pad)

    bias_p, gamma_p, beta_p = _pad_vec(bias), _pad_vec(gamma), _pad_vec(beta)

    # --- Tiling: a few row blocks per phase so input DMA overlaps MXU work. ----------
    tp = _row_tile(p_total)
    nb = p_total // tp
    conv_buf_bytes = p_total * c_pad * 4
    # Fused design keeps the whole conv output VMEM-resident between phases.
    assert conv_buf_bytes <= 16 * 1024 * 1024, (
        "fused ConvBlock kernel: conv buffer too large for VMEM; see TODO(synk)")

    y = pl.pallas_call(
        _make_fused_kernel(p_total, float(eps)),
        out_shape=jax.ShapeDtypeStruct((p_total, c_pad), jnp.float32),
        grid_spec=pltpu.PrefetchScalarGridSpec(
            num_scalar_prefetch=0,
            grid=(2, nb),                         # (phase, row block) -- phase 0 first
            in_specs=[
                # Patches: per-block in phase 0, parked on block 0 in phase 1.
                pl.BlockSpec((tp, k_pad), lambda p, b: (b * (1 - p), 0)),
                # Weights / bias / gamma / beta: constant index -> resident, one DMA.
                pl.BlockSpec((k_pad, c_pad), lambda p, b: (0, 0)),
                pl.BlockSpec((1, c_pad), lambda p, b: (0, 0)),
                pl.BlockSpec((1, c_pad), lambda p, b: (0, 0)),
                pl.BlockSpec((1, c_pad), lambda p, b: (0, 0)),
            ],
            # Output blocks only advance in phase 1 (no garbage write-backs in phase 0).
            out_specs=pl.BlockSpec((tp, c_pad), lambda p, b: (b * p, 0)),
            scratch_shapes=[
                pltpu.VMEM((nb, tp, c_pad), jnp.float32),   # conv output, all blocks
                pltpu.VMEM((2, c_pad), jnp.float32),        # packed sum/ssq -> scale/shift
            ],
        ),
        compiler_params=pltpu.CompilerParams(
            # Sequential dependencies: stats accumulate across blocks, phase 1 after 0.
            dimension_semantics=("arbitrary", "arbitrary")),
    )(patches, w_mat, bias_p, gamma_p, beta_p)

    # Tiny epilogue (channel slice + NHWC->NCHW) left to XLA; it fuses for free.
    y_nhwc = y[:, :c_out].reshape(n, h, w, c_out)
    return jnp.transpose(y_nhwc, (0, 3, 1, 2))


def _reference(x_nchw, weight, bias, gamma, beta, eps=1e-5):
    """Pure-JAX f32 reference matching PyTorch ConvBlock in training mode."""
    x_nhwc = jnp.transpose(x_nchw, (0, 2, 3, 1)).astype(jnp.float32)
    w_hwio = jnp.transpose(weight, (2, 3, 1, 0)).astype(jnp.float32)
    kh, kw = weight.shape[2], weight.shape[3]
    y = lax.conv_general_dilated(
        x_nhwc, w_hwio, window_strides=(1, 1),
        padding=[(kh // 2, kh // 2), (kw // 2, kw // 2)],
        dimension_numbers=("NHWC", "HWIO", "NHWC"))
    y = y + bias.reshape(1, 1, 1, -1)
    mean = jnp.mean(y, axis=(0, 1, 2), keepdims=True)
    var = jnp.mean((y - mean) ** 2, axis=(0, 1, 2), keepdims=True)
    y = (y - mean) * lax.rsqrt(var + eps)
    y = y * gamma.reshape(1, 1, 1, -1) + beta.reshape(1, 1, 1, -1)
    y = jnp.maximum(y, 0.0)
    return jnp.transpose(y, (0, 3, 1, 2))


if __name__ == "__main__":
    # Small shapes consistent with the module: N=2, C_in=4, C_out=8, H=W=16, k=3.
    N, C_IN, C_OUT, H, W, K = 2, 4, 8, 16, 16, 3

    key = jax.random.PRNGKey(0)
    kx, kw_, kb, kg, kbe = jax.random.split(key, 5)
    x = jax.random.normal(kx, (N, C_IN, H, W), dtype=jnp.float32)
    weight = 0.1 * jax.random.normal(kw_, (C_OUT, C_IN, K, K), dtype=jnp.float32)
    bias = 0.1 * jax.random.normal(kb, (C_OUT,), dtype=jnp.float32)
    gamma = 1.0 + 0.05 * jax.random.normal(kg, (C_OUT,), dtype=jnp.float32)
    beta = 0.05 * jax.random.normal(kbe, (C_OUT,), dtype=jnp.float32)

    out = conv_block(x, weight, bias, gamma, beta)
    out = jax.block_until_ready(out)

    ref = jax.block_until_ready(_reference(x, weight, bias, gamma, beta))
    assert out.shape == (N, C_OUT, H, W)
    # Kernel feeds the MXU bf16 operands (f32 accumulation); reference is pure f32,
    # so compare at bf16-input precision tolerance (precision choice, not a bug bound).
    assert jnp.allclose(out, ref, atol=3e-2, rtol=3e-2), "mismatch vs reference"

    print("KERNEL_OK")
</pallas_src>

<mosaic_0001>
module attributes {stable_mosaic.version = 11 : i64} {
  func.func @kernel(%arg0: i32, %arg1: i32, %arg2: memref<256x128xbf16, #tpu.memory_space<vmem>>, %arg3: memref<128x128xbf16, #tpu.memory_space<vmem>>, %arg4: memref<1x128xf32, #tpu.memory_space<vmem>>, %arg5: memref<1x128xf32, #tpu.memory_space<vmem>>, %arg6: memref<1x128xf32, #tpu.memory_space<vmem>>, %arg7: memref<256x128xf32, #tpu.memory_space<vmem>>, %arg8: memref<2x256x128xf32, #tpu.memory_space<vmem>>, %arg9: memref<2x128xf32, #tpu.memory_space<vmem>>) attributes {dimension_semantics = [#tpu.dimension_semantics<arbitrary>, #tpu.dimension_semantics<arbitrary>], iteration_bounds = array<i64: 2, 2>, scalar_prefetch = 0 : i64, scratch_operands = 2 : i64, tpu.core_type = #tpu.core_type<tc>, window_params = [{transform_indices = @transform_0, window_bounds = array<i64: 256, 128>}, {pipeline_mode = #tpu.pipeline_mode<synchronous>, transform_indices = @transform_1, window_bounds = array<i64: 128, 128>}, {pipeline_mode = #tpu.pipeline_mode<synchronous>, transform_indices = @transform_2, window_bounds = array<i64: 1, 128>}, {pipeline_mode = #tpu.pipeline_mode<synchronous>, transform_indices = @transform_3, window_bounds = array<i64: 1, 128>}, {pipeline_mode = #tpu.pipeline_mode<synchronous>, transform_indices = @transform_4, window_bounds = array<i64: 1, 128>}, {transform_indices = @transform_5, window_bounds = array<i64: 256, 128>}]} {
    %c0_i32 = arith.constant 0 : i32
    %0 = arith.cmpi eq, %arg0, %c0_i32 : i32
    %1 = arith.extui %0 : i1 to i32
    %c0_i32_0 = arith.constant 0 : i32
    %2 = arith.cmpi ne, %1, %c0_i32_0 : i32
    scf.if %2 {
      %c0_i32_2 = arith.constant 0 : i32
      %6 = arith.cmpi eq, %arg1, %c0_i32_2 : i32
      %7 = arith.extui %6 : i1 to i32
      %c0_i32_3 = arith.constant 0 : i32
      %8 = arith.cmpi ne, %7, %c0_i32_3 : i32
      scf.if %8 {
        %cst_20 = arith.constant 0.000000e+00 : f32
        %30 = vector.broadcast %cst_20 : f32 to vector<2x128xf32>
        %c0_21 = arith.constant 0 : index
        %c0_22 = arith.constant 0 : index
        %31 = vector.load %arg9[%c0_21, %c0_22] : memref<2x128xf32, #tpu.memory_space<vmem>>, vector<2x128xf32>
        tpu.vector_store %arg9[%c0_21, %c0_22], %30 {strides = array<i32>} : memref<2x128xf32, #tpu.memory_space<vmem>>, vector<2x128xf32>,
      } else {
      }
      %c0 = arith.constant 0 : index
      %c0_4 = arith.constant 0 : index
      %9 = vector.load %arg2[%c0, %c0_4] : memref<256x128xbf16, #tpu.memory_space<vmem>>, vector<256x128xbf16>
      %c0_5 = arith.constant 0 : index
      %c0_6 = arith.constant 0 : index
      %10 = vector.load %arg3[%c0_5, %c0_6] : memref<128x128xbf16, #tpu.memory_space<vmem>>, vector<128x128xbf16>
      %cst = arith.constant dense<0.000000e+00> : vector<256x128xf32>
      %11 = tpu.matmul %9, %10, %cst {dimension_numbers = #tpu.dot_dimension_numbers<[1], [0], [0], [1], [0, 0, 1, 1], [], []>} : vector<256x128xbf16>, vector<128x128xbf16>, vector<256x128xf32> -> vector<256x128xf32>
      %c0_7 = arith.constant 0 : index
      %c0_8 = arith.constant 0 : index
      %12 = vector.load %arg4[%c0_7, %c0_8] : memref<1x128xf32, #tpu.memory_space<vmem>>, vector<1x128xf32>
      %13 = vector.broadcast %12 : vector<1x128xf32> to vector<256x128xf32>
      %14 = arith.addf %11, %13 : vector<256x128xf32>
      %15 = arith.index_cast %arg1 : i32 to index
      %c0_9 = arith.constant 0 : index
      %c0_10 = arith.constant 0 : index
      %16 = vector.load %arg8[%15, %c0_9, %c0_10] : memref<2x256x128xf32, #tpu.memory_space<vmem>>, vector<1x256x128xf32>
      %17 = vector.shape_cast %16 : vector<1x256x128xf32> to vector<256x128xf32>
      %18 = vector.shape_cast %14 : vector<256x128xf32> to vector<1x256x128xf32>
      tpu.vector_store %arg8[%15, %c0_9, %c0_10], %18 {strides = array<i32>} : memref<2x256x128xf32, #tpu.memory_space<vmem>>, vector<1x256x128xf32>,
      %c0_11 = arith.constant 0 : index
      %c0_12 = arith.constant 0 : index
      %19 = vector.load %arg9[%c0_11, %c0_12] : memref<2x128xf32, #tpu.memory_space<vmem>>, vector<1x128xf32>
      %cst_13 = arith.constant dense<0.000000e+00> : vector<128xf32>
      %20 = vector.multi_reduction <add>, %14, %cst_13 [0] : vector<256x128xf32> to vector<128xf32>
      %21 = vector.shape_cast %20 : vector<128xf32> to vector<1x128xf32>
      %22 = arith.addf %19, %21 : vector<1x128xf32>
      %c0_14 = arith.constant 0 : index
      %c0_15 = arith.constant 0 : index
      %23 = vector.load %arg9[%c0_14, %c0_15] : memref<2x128xf32, #tpu.memory_space<vmem>>, vector<1x128xf32>
      tpu.vector_store %arg9[%c0_14, %c0_15], %22 {strides = array<i32>} : memref<2x128xf32, #tpu.memory_space<vmem>>, vector<1x128xf32>,
      %c1 = arith.constant 1 : index
      %c0_16 = arith.constant 0 : index
      %24 = vector.load %arg9[%c1, %c0_16] : memref<2x128xf32, #tpu.memory_space<vmem>>, vector<1x128xf32>
      %25 = arith.mulf %14, %14 : vector<256x128xf32>
      %cst_17 = arith.constant dense<0.000000e+00> : vector<128xf32>
      %26 = vector.multi_reduction <add>, %25, %cst_17 [0] : vector<256x128xf32> to vector<128xf32>
      %27 = vector.shape_cast %26 : vector<128xf32> to vector<1x128xf32>
      %28 = arith.addf %24, %27 : vector<1x128xf32>
      %c1_18 = arith.constant 1 : index
      %c0_19 = arith.constant 0 : index
      %29 = vector.load %arg9[%c1_18, %c0_19] : memref<2x128xf32, #tpu.memory_space<vmem>>, vector<1x128xf32>
      tpu.vector_store %arg9[%c1_18, %c0_19], %28 {strides = array<i32>} : memref<2x128xf32, #tpu.memory_space<vmem>>, vector<1x128xf32>,
    } else {
    }
    %c1_i32 = arith.constant 1 : i32
    %3 = arith.cmpi eq, %arg0, %c1_i32 : i32
    %4 = arith.extui %3 : i1 to i32
    %c0_i32_1 = arith.constant 0 : i32
    %5 = arith.cmpi ne, %4, %c0_i32_1 : i32
    scf.if %5 {
      %c0_i32_2 = arith.constant 0 : i32
      %6 = arith.cmpi eq, %arg1, %c0_i32_2 : i32
      %7 = arith.extui %6 : i1 to i32
      %c0_i32_3 = arith.constant 0 : i32
      %8 = arith.cmpi ne, %7, %c0_i32_3 : i32
      scf.if %8 {
        %c0_10 = arith.constant 0 : index
        %c0_11 = arith.constant 0 : index
        %21 = vector.load %arg9[%c0_10, %c0_11] : memref<2x128xf32, #tpu.memory_space<vmem>>, vector<1x128xf32>
        %cst_12 = arith.constant 0.001953125 : f32
        %22 = vector.broadcast %cst_12 : f32 to vector<1x128xf32>
        %23 = arith.mulf %21, %22 : vector<1x128xf32>
        %c1_13 = arith.constant 1 : index
        %c0_14 = arith.constant 0 : index
        %24 = vector.load %arg9[%c1_13, %c0_14] : memref<2x128xf32, #tpu.memory_space<vmem>>, vector<1x128xf32>
        %cst_15 = arith.constant 0.001953125 : f32
        %25 = vector.broadcast %cst_15 : f32 to vector<1x128xf32>
        %26 = arith.mulf %24, %25 : vector<1x128xf32>
        %27 = arith.mulf %23, %23 : vector<1x128xf32>
        %28 = arith.subf %26, %27 : vector<1x128xf32>
        %cst_16 = arith.constant 0.000000e+00 : f32
        %29 = vector.broadcast %cst_16 : f32 to vector<1x128xf32>
        %30 = arith.maximumf %28, %29 : vector<1x128xf32>
        %cst_17 = arith.constant 9.99999974E-6 : f32
        %31 = vector.broadcast %cst_17 : f32 to vector<1x128xf32>
        %32 = arith.addf %30, %31 : vector<1x128xf32>
        %33 = math.rsqrt %32 : vector<1x128xf32>
        %c0_18 = arith.constant 0 : index
        %c0_19 = arith.constant 0 : index
        %34 = vector.load %arg5[%c0_18, %c0_19] : memref<1x128xf32, #tpu.memory_space<vmem>>, vector<1x128xf32>
        %35 = arith.mulf %34, %33 : vector<1x128xf32>
        %c0_20 = arith.constant 0 : index
        %c0_21 = arith.constant 0 : index
        %36 = vector.load %arg6[%c0_20, %c0_21] : memref<1x128xf32, #tpu.memory_space<vmem>>, vector<1x128xf32>
        %37 = arith.mulf %23, %35 : vector<1x128xf32>
        %38 = arith.subf %36, %37 : vector<1x128xf32>
        %c0_22 = arith.constant 0 : index
        %c0_23 = arith.constant 0 : index
        %39 = vector.load %arg9[%c0_22, %c0_23] : memref<2x128xf32, #tpu.memory_space<vmem>>, vector<1x128xf32>
        tpu.vector_store %arg9[%c0_22, %c0_23], %35 {strides = array<i32>} : memref<2x128xf32, #tpu.memory_space<vmem>>, vector<1x128xf32>,
        %c1_24 = arith.constant 1 : index
        %c0_25 = arith.constant 0 : index
        %40 = vector.load %arg9[%c1_24, %c0_25] : memref<2x128xf32, #tpu.memory_space<vmem>>, vector<1x128xf32>
        tpu.vector_store %arg9[%c1_24, %c0_25], %38 {strides = array<i32>} : memref<2x128xf32, #tpu.memory_space<vmem>>, vector<1x128xf32>,
      } else {
      }
      %9 = arith.index_cast %arg1 : i32 to index
      %c0 = arith.constant 0 : index
      %c0_4 = arith.constant 0 : index
      %10 = vector.load %arg8[%9, %c0, %c0_4] : memref<2x256x128xf32, #tpu.memory_space<vmem>>, vector<1x256x128xf32>
      %11 = vector.shape_cast %10 : vector<1x256x128xf32> to vector<256x128xf32>
      %c0_5 = arith.constant 0 : index
      %c0_6 = arith.constant 0 : index
      %12 = vector.load %arg9[%c0_5, %c0_6] : memref<2x128xf32, #tpu.memory_space<vmem>>, vector<1x128xf32>
      %13 = vector.broadcast %12 : vector<1x128xf32> to vector<256x128xf32>
      %14 = arith.mulf %11, %13 : vector<256x128xf32>
      %c1 = arith.constant 1 : index
      %c0_7 = arith.constant 0 : index
      %15 = vector.load %arg9[%c1, %c0_7] : memref<2x128xf32, #tpu.memory_space<vmem>>, vector<1x128xf32>
      %16 = vector.broadcast %15 : vector<1x128xf32> to vector<256x128xf32>
      %17 = arith.addf %14, %16 : vector<256x128xf32>
      %cst = arith.constant 0.000000e+00 : f32
      %18 = vector.broadcast %cst : f32 to vector<256x128xf32>
      %19 = arith.maximumf %17, %18 : vector<256x128xf32>
      %c0_8 = arith.constant 0 : index
      %c0_9 = arith.constant 0 : index
      %20 = vector.load %arg7[%c0_8, %c0_9] : memref<256x128xf32, #tpu.memory_space<vmem>>, vector<256x128xf32>
      tpu.vector_store %arg7[%c0_8, %c0_9], %19 {strides = array<i32>} : memref<256x128xf32, #tpu.memory_space<vmem>>, vector<256x128xf32>,
    } else {
    }
    return
  }
  func.func @transform_0(%arg0: i32, %arg1: i32) -> (i32, i32) {
    %c1_i32 = arith.constant 1 : i32
    %0 = arith.subi %c1_i32, %arg0 : i32
    %1 = arith.muli %arg1, %0 : i32
    %c0_i32 = arith.constant 0 : i32
    %c0_i32_0 = arith.constant 0 : i32
    return %1, %c0_i32 : i32, i32
  }
  func.func @transform_1(%arg0: i32, %arg1: i32) -> (i32, i32) {
    %c0_i32 = arith.constant 0 : i32
    %c0_i32_0 = arith.constant 0 : i32
    %c0_i32_1 = arith.constant 0 : i32
    return %c0_i32, %c0_i32_0 : i32, i32
  }
  func.func @transform_2(%arg0: i32, %arg1: i32) -> (i32, i32) {
    %c0_i32 = arith.constant 0 : i32
    %c0_i32_0 = arith.constant 0 : i32
    %c0_i32_1 = arith.constant 0 : i32
    return %c0_i32, %c0_i32_0 : i32, i32
  }
  func.func @transform_3(%arg0: i32, %arg1: i32) -> (i32, i32) {
    %c0_i32 = arith.constant 0 : i32
    %c0_i32_0 = arith.constant 0 : i32
    %c0_i32_1 = arith.constant 0 : i32
    return %c0_i32, %c0_i32_0 : i32, i32
  }
  func.func @transform_4(%arg0: i32, %arg1: i32) -> (i32, i32) {
    %c0_i32 = arith.constant 0 : i32
    %c0_i32_0 = arith.constant 0 : i32
    %c0_i32_1 = arith.constant 0 : i32
    return %c0_i32, %c0_i32_0 : i32, i32
  }
  func.func @transform_5(%arg0: i32, %arg1: i32) -> (i32, i32) {
    %0 = arith.muli %arg1, %arg0 : i32
    %c0_i32 = arith.constant 0 : i32
    %c0_i32_0 = arith.constant 0 : i32
    return %0, %c0_i32 : i32, i32
  }
}

</mosaic_0001>

<llo_original>
// kernel: conv_block.1
$region0: #{conv_block.1}
  #allocation0 [shape = 'u32[]', space=smem, size = 0x4, offset = 0x4, fixed_abs, tag = 'smem constant byte address 0x4 - core index']
  #allocation1 [shape = 'u32[144,128]{1,0:T(1,128)}', space=vmem, size = 0x12000, scoped, tag = 'internal scratch']
  #allocation2 [shape = 'f32[2,256,128]{2,1,0:T(8,128)}', space=vmem, size = 0x40000, scoped, tag = 'scratch operand']
  #allocation3 [shape = 'f32[2,128]{1,0:T(2,128)}', space=vmem, size = 0x400, scoped, tag = 'scratch operand']
  %s0 = inlined_call_operand.vmem [shape: bf16[512,128], index: 0, kind: input, shape index: {}]
  %s1 = inlined_call_operand.vmem [shape: bf16[128,128], index: 1, kind: input, shape index: {}]
  %s2 = inlined_call_operand.vmem [shape: f32[1,128], index: 2, kind: input, shape index: {}]
  %s3 = inlined_call_operand.vmem [shape: f32[1,128], index: 3, kind: input, shape index: {}]
  %s4 = inlined_call_operand.vmem [shape: f32[1,128], index: 4, kind: input, shape index: {}]
  %s5 = inlined_call_operand.vmem [shape: f32[512,128], index: 5, kind: output, shape index: {}]
  %s6 = sld [smem:[#allocation0]]
  $region69: #{conv_block.1} parent=0
    _
  %s8 = ssub.s32 1, %s6
  %s9 = scalar_select 0, %s8, %s6
  loop: start=0, step=1, limit=6
  $region2: #{conv_block.1} parent=0 // loop_pre_header
    _
  $region3: #{conv_block.1} parent=0 // loop_header
    %s11 = sphi 0, %s15
    %p12 = scmp.ge.s32.totalorder %s11, 6
    %s18 = sphi 0, %s30
    %s19 = sphi 0, %s26
    %s20 = sphi 0, %s18
    %s21 = sphi 0, %s19
    %s22 = sphi 0, %s20
    %s23 = sphi 0, %s21
    %s37 = sphi 0, %s39
    %s40 = sphi 0, %s37
    %s41 = sphi 0, %s40
    %s57 = sphi 0, %s41
    %s61 = sphi 0, %s61
    %s63 = sphi 0, %s61
    %s64 = sphi 0, %s63
    %s78 = sphi 0, %s64
    %s82 = sphi 0, %s82
    %s84 = sphi 0, %s82
    %s85 = sphi 0, %s84
    %s99 = sphi 0, %s85
    %s103 = sphi 0, %s103
    %s105 = sphi 0, %s103
    %s106 = sphi 0, %s105
    %s120 = sphi 0, %s106
    %s124 = sphi 0, %s124
    %s126 = sphi 0, %s124
    %s127 = sphi 0, %s126
    %s141 = sphi 0, %s127
    %s149 = sphi 0, %s151
    %s152 = sphi 0, %s149
    %s153 = sphi 0, %s152
    %s169 = sphi 0, %s153
  $region4: #{conv_block.1} parent=0 // loop_header_branch
    %14 = sbr.rel (%p12) target = $region8
  $region5: #{conv_block.1} parent=0 // loop_body
    %s16 = ssub.s32 %s11, 1
    %s17 = ssub.s32 %s11, 2
    %s24 = sadd.s32 1, %s19
    %p25 = scmp.ge.s32.totalorder %s24, 2
    %s26 = scalar_select %p25, 0, %s24
    %s27 = sadd.s32 1, %s18
    %s28 = scalar_select %p25, %s27, %s18
    %p29 = scmp.ge.s32.totalorder %s28, 2
    %s30 = scalar_select %p29, 0, %s28
    %s31 = ssub.s32 1, %s18
    %s32 = smul.u32 %s19, %s31
    %s33 = ssub.s32 1, %s30
    %s34 = smul.u32 %s26, %s33
    %s35 = ssub.s32 %s32, %s34
    %p36 = scmp.eq.s32.totalorder %s35, 0
    %s38 = sadd.s32 %s37, 1
    %s39 = scalar_select %p36, %s37, %s38
    %p42 = pneg %p36
    %p43 = scmp.eq.s32.totalorder %s11, 3
    %p44 = por %p42, %p43
    %p45 = scmp.ne.s32.totalorder %s37, %s40
    %p46 = scmp.eq.s32.totalorder %s11, 0
    %p47 = por %p45, %p46
    %p48 = scmp.ne.s32.totalorder %s37, %s40
    %p49 = scmp.eq.s32.totalorder %s16, 3
    %p50 = por %p48, %p49
    %p51 = scmp.ne.s32.totalorder %s40, %s41
    %p52 = scmp.eq.s32.totalorder %s16, 0
    %p53 = por %p51, %p52
    %p54 = scmp.ne.s32.totalorder %s40, %s41
    %p55 = scmp.eq.s32.totalorder %s17, 3
    %p56 = por %p54, %p55
    %p58 = scmp.ne.s32.totalorder %s41, %s57
    %p59 = scmp.eq.s32.totalorder %s17, 0
    %p60 = por %p58, %p59
    %s62 = sadd.s32 %s61, 1
    %p65 = scmp.eq.s32.totalorder %s11, 3
    %p66 = scmp.ne.s32.totalorder %s61, %s63
    %p67 = scmp.eq.s32.totalorder %s11, 0
    %p68 = por %p66, %p67
    %p69 = scmp.ne.s32.totalorder %s61, %s63
    %p70 = scmp.eq.s32.totalorder %s16, 3
    %p71 = por %p69, %p70
    %p72 = scmp.ne.s32.totalorder %s63, %s64
    %p73 = scmp.eq.s32.totalorder %s16, 0
    %p74 = por %p72, %p73
    %p75 = scmp.ne.s32.totalorder %s63, %s64
    %p76 = scmp.eq.s32.totalorder %s17, 3
    %p77 = por %p75, %p76
    %p79 = scmp.ne.s32.totalorder %s64, %s78
    %p80 = scmp.eq.s32.totalorder %s17, 0
    %p81 = por %p79, %p80
    %s83 = sadd.s32 %s82, 1
    %p86 = scmp.eq.s32.totalorder %s11, 3
    %p87 = scmp.ne.s32.totalorder %s82, %s84
    %p88 = scmp.eq.s32.totalorder %s11, 0
    %p89 = por %p87, %p88
    %p90 = scmp.ne.s32.totalorder %s82, %s84
    %p91 = scmp.eq.s32.totalorder %s16, 3
    %p92 = por %p90, %p91
    %p93 = scmp.ne.s32.totalorder %s84, %s85
    %p94 = scmp.eq.s32.totalorder %s16, 0
    %p95 = por %p93, %p94
    %p96 = scmp.ne.s32.totalorder %s84, %s85
    %p97 = scmp.eq.s32.totalorder %s17, 3
    %p98 = por %p96, %p97
    %p100 = scmp.ne.s32.totalorder %s85, %s99
    %p101 = scmp.eq.s32.totalorder %s17, 0
    %p102 = por %p100, %p101
    %s104 = sadd.s32 %s103, 1
    %p107 = scmp.eq.s32.totalorder %s11, 3
    %p108 = scmp.ne.s32.totalorder %s103, %s105
    %p109 = scmp.eq.s32.totalorder %s11, 0
    %p110 = por %p108, %p109
    %p111 = scmp.ne.s32.totalorder %s103, %s105
    %p112 = scmp.eq.s32.totalorder %s16, 3
    %p113 = por %p111, %p112
    %p114 = scmp.ne.s32.totalorder %s105, %s106
    %p115 = scmp.eq.s32.totalorder %s16, 0
    %p116 = por %p114, %p115
    %p117 = scmp.ne.s32.totalorder %s105, %s106
    %p118 = scmp.eq.s32.totalorder %s17, 3
    %p119 = por %p117, %p118
    %p121 = scmp.ne.s32.totalorder %s106, %s120
    %p122 = scmp.eq.s32.totalorder %s17, 0
    %p123 = por %p121, %p122
    %s125 = sadd.s32 %s124, 1
    %p128 = scmp.eq.s32.totalorder %s11, 3
    %p129 = scmp.ne.s32.totalorder %s124, %s126
    %p130 = scmp.eq.s32.totalorder %s11, 0
    %p131 = por %p129, %p130
    %p132 = scmp.ne.s32.totalorder %s124, %s126
    %p133 = scmp.eq.s32.totalorder %s16, 3
    %p134 = por %p132, %p133
    %p135 = scmp.ne.s32.totalorder %s126, %s127
    %p136 = scmp.eq.s32.totalorder %s16, 0
    %p137 = por %p135, %p136
    %p138 = scmp.ne.s32.totalorder %s126, %s127
    %p139 = scmp.eq.s32.totalorder %s17, 3
    %p140 = por %p138, %p139
    %p142 = scmp.ne.s32.totalorder %s127, %s141
    %p143 = scmp.eq.s32.totalorder %s17, 0
    %p144 = por %p142, %p143
    %s145 = smul.u32 %s19, %s18
    %s146 = smul.u32 %s26, %s30
    %s147 = ssub.s32 %s145, %s146
    %p148 = scmp.eq.s32.totalorder %s147, 0
    %s150 = sadd.s32 %s149, 1
    %s151 = scalar_select %p148, %s149, %s150
    %p154 = pneg %p148
    %p155 = scmp.eq.s32.totalorder %s11, 3
    %p156 = por %p154, %p155
    %p157 = scmp.ne.s32.totalorder %s149, %s152
    %p158 = scmp.eq.s32.totalorder %s11, 0
    %p159 = por %p157, %p158
    %p160 = scmp.ne.s32.totalorder %s149, %s152
    %p161 = scmp.eq.s32.totalorder %s16, 3
    %p162 = por %p160, %p161
    %p163 = scmp.ne.s32.totalorder %s152, %s153
    %p164 = scmp.eq.s32.totalorder %s16, 0
    %p165 = por %p163, %p164
    %p166 = scmp.ne.s32.totalorder %s152, %s153
    %p167 = scmp.eq.s32.totalorder %s17, 3
    %p168 = por %p166, %p167
    %p170 = scmp.ne.s32.totalorder %s153, %s169
    %p171 = scmp.eq.s32.totalorder %s17, 0
    %p172 = por %p170, %p171
    %p173 = scmp.le.s32.totalorder 1, %s11
    %p174 = scmp.lt.s32.totalorder %s11, 5
    %p175 = pnand %p173, %p174
    %p176 = pneg %p175
    // Predicated region
    $region9: #{conv_block.1} parent=5 // pred_check
      _
    $region10: #{conv_block.1} parent=5 // pred_check_branch
      %178 = sbr.rel (%p175) target = $region12
    $region11: #{conv_block.1} parent=5 // pred_region
      %s179 = ssub.s32 %s11, 1
      // Predicated region
      $region13: #{conv_block.1} parent=11 // pred_check
        %p180 = pneg %p74
      $region14: #{conv_block.1} parent=11 // pred_check_branch
        %182 = sbr.rel (%p180) target = $region16
      $region15: #{conv_block.1} parent=11 // pred_region
        _
      $region16: #{conv_block.1} parent=11 // pred_fallthru
        _
      // Predicated region
      $region17: #{conv_block.1} parent=11 // pred_check
        %p183 = pneg %p95
      $region18: #{conv_block.1} parent=11 // pred_check_branch
        %185 = sbr.rel (%p183) target = $region20
      $region19: #{conv_block.1} parent=11 // pred_region
        _
      $region20: #{conv_block.1} parent=11 // pred_fallthru
        _
      // Predicated region
      $region21: #{conv_block.1} parent=11 // pred_check
        %p186 = pneg %p116
      $region22: #{conv_block.1} parent=11 // pred_check_branch
        %188 = sbr.rel (%p186) target = $region24
      $region23: #{conv_block.1} parent=11 // pred_region
        _
      $region24: #{conv_block.1} parent=11 // pred_fallthru
        _
      // Predicated region
      $region25: #{conv_block.1} parent=11 // pred_check
        %p189 = pneg %p137
      $region26: #{conv_block.1} parent=11 // pred_check_branch
        %191 = sbr.rel (%p189) target = $region28
      $region27: #{conv_block.1} parent=11 // pred_region
        _
      $region28: #{conv_block.1} parent=11 // pred_fallthru
        _
    $region12: #{conv_block.1} parent=5 // pred_fallthru
      _
    %p192 = scmp.lt.s32.totalorder %s11, 4
    // Predicated region
    $region29: #{conv_block.1} parent=5 // pred_check
      %p193 = pneg %p192
    $region30: #{conv_block.1} parent=5 // pred_check_branch
      %195 = sbr.rel (%p193) target = $region32
    $region31: #{conv_block.1} parent=5 // pred_region
      // Predicated region
      $region33: #{conv_block.1} parent=31 // pred_check
        %p196 = pneg %p47
      $region34: #{conv_block.1} parent=31 // pred_check_branch
        %198 = sbr.rel (%p196) target = $region36
      $region35: #{conv_block.1} parent=31 // pred_region
        %s199 = ssub.s32 1, %s18
        %s200 = smul.u32 %s19, %s199
        %s201 = smul.u32 32, %s200
        %p202 = scmp.lt.s32.totalorder %s201, 63
        %s203 = scalar_select %p202, %s201, 63
        %s204 = smul.addr %s203, 4
        %s205 = scalar_lea.vmem %s0, %s204
        %s206 = ssub.s32 1, %s18
        %s207 = smul.u32 %s19, %s206
        %s208 = smul.u32 32, %s207
      $region36: #{conv_block.1} parent=31 // pred_fallthru
        _
    $region32: #{conv_block.1} parent=5 // pred_fallthru
      _
    %p209 = scmp.le.s32.totalorder 1, %s11
    %p210 = scmp.lt.s32.totalorder %s11, 5
    %p211 = pnand %p209, %p210
    %p212 = pneg %p211
    // Predicated region
    $region37: #{conv_block.1} parent=5 // pred_check
      _
    $region38: #{conv_block.1} parent=5 // pred_check_branch
      %214 = sbr.rel (%p211) target = $region40
    $region39: #{conv_block.1} parent=5 // pred_region
      %s215 = ssub.s32 %s11, 1
      %s216 = ssub.s32 1, %s20
      %s217 = smul.u32 %s21, %s216
      %s218 = smul.u32 32, %s217
      %p219 = scmp.lt.s32.totalorder %s218, 63
      %s220 = scalar_select %p219, %s218, 63
      %s221 = smul.addr %s220, 4
      %s222 = scalar_lea.vmem %s0, %s221
      %p223 = pneg %p53
      %p224 = pneg %p50
      %p225 = pneg %p74
      %p226 = pneg %p71
      %p227 = pneg %p95
      %p228 = pneg %p92
      %p229 = pneg %p116
      %p230 = pneg %p113
      %p231 = pneg %p137
      %p232 = pneg %p134
      %p233 = pneg %p165
      %p234 = pneg %p162
      %s235 = smul.u32 %s21, %s20
      %s236 = smul.u32 32, %s235
      %p237 = scmp.lt.s32.totalorder %s236, 63
      %s238 = scalar_select %p237, %s236, 63
      %s239 = smul.addr %s238, 8
      %s240 = scalar_lea.vmem %s5, %s239
      %s241 = ssub.s32 1, %s20
      %s242 = smul.u32 %s21, %s241
      %s243 = smul.u32 32, %s242
      %p244 = scmp.lt.s32.totalorder %s243, 63
      %s245 = scalar_select %p244, %s243, 63
      %s246 = smul.addr %s245, 4
      %s247 = scalar_lea.vmem %s0, %s246
      %s248 = ssub.s32 1, %s20
      %s249 = smul.u32 %s21, %s248
      %s250 = smul.u32 32, %s249
      %s251 = smul.u32 %s21, %s20
      %s252 = smul.u32 32, %s251
      %p253 = scmp.lt.s32.totalorder %s252, 63
      %s254 = scalar_select %p253, %s252, 63
      %s255 = smul.addr %s254, 8
      %s256 = scalar_lea.vmem %s5, %s255
      %s257 = smul.u32 %s21, %s20
      %s258 = smul.u32 32, %s257
      %p260 = scmp.eq.s32.totalorder %s20, 0
      // Predicated region
      $region41: #{conv_block.1} parent=39 // pred_check
        %p261 = pneg %p260
      $region42: #{conv_block.1} parent=39 // pred_check_branch
        %263 = sbr.rel (%p261) target = $region44
      $region43: #{conv_block.1} parent=39 // pred_region
        %p264 = scmp.eq.s32.totalorder %s21, 0
        // Predicated region
        $region45: #{conv_block.1} parent=43 // pred_check
          %p265 = pneg %p264
        $region46: #{conv_block.1} parent=43 // pred_check_branch
          %267 = sbr.rel (%p265) target = $region48
        $region47: #{conv_block.1} parent=43 // pred_region
          %268 = vst [vmem:[#allocation3] sm:$0x3] 0.0
        $region48: #{conv_block.1} parent=43 // pred_fallthru
          _
        %v269 = vld [vmem:[%s247] sm:$0xf]
        %v270 = vld [vmem:[%s247 + $0x4] sm:$0xf]
        %v271 = vld [vmem:[%s247 + $0x8] sm:$0xf]
        %v272 = vld [vmem:[%s247 + $0xc] sm:$0xf]
        %v273 = vld [vmem:[%s247 + $0x10] sm:$0xf]
        %v274 = vld [vmem:[%s247 + $0x14] sm:$0xf]
        %v275 = vld [vmem:[%s247 + $0x18] sm:$0xf]
        %v276 = vld [vmem:[%s247 + $0x1c] sm:$0xf]
        %v277 = vld [vmem:[%s247 + $0x20] sm:$0xf]
        %v278 = vld [vmem:[%s247 + $0x24] sm:$0xf]
        %v279 = vld [vmem:[%s247 + $0x28] sm:$0xf]
        %v280 = vld [vmem:[%s247 + $0x2c] sm:$0xf]
        %v281 = vld [vmem:[%s247 + $0x30] sm:$0xf]
        %v282 = vld [vmem:[%s247 + $0x34] sm:$0xf]
        %v283 = vld [vmem:[%s247 + $0x38] sm:$0xf]
        %v284 = vld [vmem:[%s247 + $0x3c] sm:$0xf]
        %v285 = vld [vmem:[%s247 + $0x40] sm:$0xf]
        %v286 = vld [vmem:[%s247 + $0x44] sm:$0xf]
        %v287 = vld [vmem:[%s247 + $0x48] sm:$0xf]
        %v288 = vld [vmem:[%s247 + $0x4c] sm:$0xf]
        %v289 = vld [vmem:[%s247 + $0x50] sm:$0xf]
        %v290 = vld [vmem:[%s247 + $0x54] sm:$0xf]
        %v291 = vld [vmem:[%s247 + $0x58] sm:$0xf]
        %v292 = vld [vmem:[%s247 + $0x5c] sm:$0xf]
        %v293 = vld [vmem:[%s247 + $0x60] sm:$0xf]
        %v294 = vld [vmem:[%s247 + $0x64] sm:$0xf]
        %v295 = vld [vmem:[%s247 + $0x68] sm:$0xf]
        %v296 = vld [vmem:[%s247 + $0x6c] sm:$0xf]
        %v297 = vld [vmem:[%s247 + $0x70] sm:$0xf]
        %v298 = vld [vmem:[%s247 + $0x74] sm:$0xf]
        %v299 = vld [vmem:[%s247 + $0x78] sm:$0xf]
        %v300 = vld [vmem:[%s247 + $0x7c] sm:$0xf]
        %v301 = vld [vmem:[%s1] sm:$0xf]
        %v302 = vld [vmem:[%s1 + $0x4] sm:$0xf]
        %v303 = vld [vmem:[%s1 + $0x8] sm:$0xf]
        %v304 = vld [vmem:[%s1 + $0xc] sm:$0xf]
        %v305 = vld [vmem:[%s1 + $0x10] sm:$0xf]
        %v306 = vld [vmem:[%s1 + $0x14] sm:$0xf]
        %v307 = vld [vmem:[%s1 + $0x18] sm:$0xf]
        %v308 = vld [vmem:[%s1 + $0x1c] sm:$0xf]
        %v309 = vld [vmem:[%s1 + $0x20] sm:$0xf]
        %v310 = vld [vmem:[%s1 + $0x24] sm:$0xf]
        %v311 = vld [vmem:[%s1 + $0x28] sm:$0xf]
        %v312 = vld [vmem:[%s1 + $0x2c] sm:$0xf]
        %v313 = vld [vmem:[%s1 + $0x30] sm:$0xf]
        %v314 = vld [vmem:[%s1 + $0x34] sm:$0xf]
        %v315 = vld [vmem:[%s1 + $0x38] sm:$0xf]
        %v316 = vld [vmem:[%s1 + $0x3c] sm:$0xf]
        %v317 = vld [vmem:[%s2] sm:$0x1]
        %v319 = vlaneseq
        %v320 = vshrl.u32 %v319, 7
        %v321 = vsub.s32 0, %v320
        %v322 = vrot.slane %v317, %v321
        %v356 = vunpack.c.l.b16 %v269
        %v357 = vunpack.c.l.b16 %v270
        %v358 = vunpack.c.l.b16 %v271
        %v359 = vunpack.c.l.b16 %v272
        %v360 = vunpack.c.l.b16 %v273
        %v361 = vunpack.c.l.b16 %v274
        %v362 = vunpack.c.l.b16 %v275
        %v363 = vunpack.c.l.b16 %v276
        %v364 = vunpack.c.l.b16 %v277
        %v365 = vunpack.c.l.b16 %v278
        %v366 = vunpack.c.l.b16 %v279
        %v367 = vunpack.c.l.b16 %v280
        %v368 = vunpack.c.l.b16 %v281
        %v369 = vunpack.c.l.b16 %v282
        %v370 = vunpack.c.l.b16 %v283
        %v371 = vunpack.c.l.b16 %v284
        %v372 = vunpack.c.l.b16 %v285
        %v373 = vunpack.c.l.b16 %v286
        %v374 = vunpack.c.l.b16 %v287
        %v375 = vunpack.c.l.b16 %v288
        %v376 = vunpack.c.l.b16 %v289
        %v377 = vunpack.c.l.b16 %v290
        %v378 = vunpack.c.l.b16 %v291
        %v379 = vunpack.c.l.b16 %v292
        %v380 = vunpack.c.l.b16 %v293
        %v381 = vunpack.c.l.b16 %v294
        %v382 = vunpack.c.l.b16 %v295
        %v383 = vunpack.c.l.b16 %v296
        %v384 = vunpack.c.l.b16 %v297
        %v385 = vunpack.c.l.b16 %v298
        %v386 = vunpack.c.l.b16 %v299
        %v387 = vunpack.c.l.b16 %v300
        %v388 = vpack.c.b16 %v357, %v356
        %v389 = vpack.c.b16 %v359, %v358
        %v390 = vpack.c.b16 %v361, %v360
        %v391 = vpack.c.b16 %v363, %v362
        %v392 = vpack.c.b16 %v365, %v364
        %v393 = vpack.c.b16 %v367, %v366
        %v394 = vpack.c.b16 %v369, %v368
        %v395 = vpack.c.b16 %v371, %v370
        %v396 = vpack.c.b16 %v373, %v372
        %v397 = vpack.c.b16 %v375, %v374
        %v398 = vpack.c.b16 %v377, %v376
        %v399 = vpack.c.b16 %v379, %v378
        %v400 = vpack.c.b16 %v381, %v380
        %v401 = vpack.c.b16 %v383, %v382
        %v402 = vpack.c.b16 %v385, %v384
        %v403 = vpack.c.b16 %v387, %v386
        %v436 = vunpack.c.l.b16 %v301
        %v437 = vunpack.c.l.b16 %v302
        %v438 = vunpack.c.l.b16 %v303
        %v439 = vunpack.c.l.b16 %v304
        %v440 = vunpack.c.l.b16 %v305
        %v441 = vunpack.c.l.b16 %v306
        %v442 = vunpack.c.l.b16 %v307
        %v443 = vunpack.c.l.b16 %v308
        %v444 = vunpack.c.l.b16 %v309
        %v445 = vunpack.c.l.b16 %v310
        %v446 = vunpack.c.l.b16 %v311
        %v447 = vunpack.c.l.b16 %v312
        %v448 = vunpack.c.l.b16 %v313
        %v449 = vunpack.c.l.b16 %v314
        %v450 = vunpack.c.l.b16 %v315
        %v451 = vunpack.c.l.b16 %v316
        %v452 = vpack.c.b16 %v437, %v436
        %v453 = vpack.c.b16 %v439, %v438
        %v454 = vpack.c.b16 %v441, %v440
        %v455 = vpack.c.b16 %v443, %v442
        %v456 = vpack.c.b16 %v445, %v444
        %v457 = vpack.c.b16 %v447, %v446
        %v458 = vpack.c.b16 %v449, %v448
        %v459 = vpack.c.b16 %v451, %v450
        %468 = vmatprep.subr.bf16.mxu0 0
        %469 = vmatpush1.bf16.msra.mxu0 %v452
        %470 = vmatprep.subr.bf16.mxu0 0
        %471 = vmatpush1.bf16.msra.mxu0 %v453
        %472 = vmatprep.subr.bf16.mxu0 0
        %473 = vmatpush1.bf16.msra.mxu0 %v454
        %474 = vmatprep.subr.bf16.mxu0 0
        %475 = vmatpush1.bf16.msra.mxu0 %v455
        %476 = vmatprep.subr.bf16.mxu0 0
        %477 = vmatpush1.bf16.msra.mxu0 %v456
        %478 = vmatprep.subr.bf16.mxu0 0
        %479 = vmatpush1.bf16.msra.mxu0 %v457
        %480 = vmatprep.subr.bf16.mxu0 0
        %481 = vmatpush1.bf16.msra.mxu0 %v458
        %482 = vmatprep.subr.bf16.mxu0 0
        %483 = vmatpush1.bf16.msra.mxu0 %v459
        %484 = vmatprep.subr.bf16.mxu0 0
        %485 = vmatpush1.bf16.msra.mxu0 0
        %486 = vmatprep.subr.bf16.mxu0 0
        %487 = vmatpush1.bf16.msra.mxu0 0
        %488 = vmatprep.subr.bf16.mxu0 0
        %489 = vmatpush1.bf16.msra.mxu0 0
        %490 = vmatprep.subr.bf16.mxu0 0
        %491 = vmatpush1.bf16.msra.mxu0 0
        %492 = vmatprep.subr.bf16.mxu0 0
        %493 = vmatpush1.bf16.msra.mxu0 0
        %494 = vmatprep.subr.bf16.mxu0 0
        %495 = vmatpush1.bf16.msra.mxu0 0
        %496 = vmatprep.subr.bf16.mxu0 0
        %497 = vmatpush1.bf16.msra.mxu0 0
        %498 = vmatprep.subr.bf16.mxu0 0
        %499 = vmatpush1.bf16.msra.mxu0 0
        %500 = vmatprep.mubr.bf16.mxu0 0
        %501 = vmatmul.mubr.bf16.gmra.mrb[0].mxu0 %v388
        %v502 = vpop.f32.mrb[0].mxu0
        %v503 = vadd.f32 %v322, %v502
        %v504 = vpop.f32.mrb[0].mxu0
        %v505 = vpop.f32.mrb[0].mxu0
        %v506 = vadd.f32 %v322, %v505
        %v507 = vpop.f32.mrb[0].mxu0
        %508 = vmatprep.mubr.bf16.mxu0 0
        %509 = vmatmul.mubr.bf16.gmra.mrb[0].mxu0 %v389
        %v510 = vpop.f32.mrb[0].mxu0
        %v511 = vadd.f32 %v322, %v510
        %v512 = vpop.f32.mrb[0].mxu0
        %v513 = vpop.f32.mrb[0].mxu0
        %v514 = vadd.f32 %v322, %v513
        %v515 = vpop.f32.mrb[0].mxu0
        %516 = vmatprep.mubr.bf16.mxu0 0
        %517 = vmatmul.mubr.bf16.gmra.mrb[0].mxu0 %v390
        %v518 = vpop.f32.mrb[0].mxu0
        %v519 = vadd.f32 %v322, %v518
        %v520 = vpop.f32.mrb[0].mxu0
        %v521 = vpop.f32.mrb[0].mxu0
        %v522 = vadd.f32 %v322, %v521
        %v523 = vpop.f32.mrb[0].mxu0
        %524 = vmatprep.mubr.bf16.mxu0 0
        %525 = vmatmul.mubr.bf16.gmra.mrb[0].mxu0 %v391
        %v526 = vpop.f32.mrb[0].mxu0
        %v527 = vadd.f32 %v322, %v526
        %v528 = vpop.f32.mrb[0].mxu0
        %v529 = vpop.f32.mrb[0].mxu0
        %v530 = vadd.f32 %v322, %v529
        %v531 = vpop.f32.mrb[0].mxu0
        %532 = vmatprep.mubr.bf16.mxu0 0
        %533 = vmatmul.mubr.bf16.gmra.mrb[0].mxu0 %v392
        %v534 = vpop.f32.mrb[0].mxu0
        %v535 = vadd.f32 %v322, %v534
        %v536 = vpop.f32.mrb[0].mxu0
        %v537 = vpop.f32.mrb[0].mxu0
        %v538 = vadd.f32 %v322, %v537
        %v539 = vpop.f32.mrb[0].mxu0
        %540 = vmatprep.mubr.bf16.mxu0 0
        %541 = vmatmul.mubr.bf16.gmra.mrb[0].mxu0 %v393
        %v542 = vpop.f32.mrb[0].mxu0
        %v543 = vadd.f32 %v322, %v542
        %v544 = vpop.f32.mrb[0].mxu0
        %v545 = vpop.f32.mrb[0].mxu0
        %v546 = vadd.f32 %v322, %v545
        %v547 = vpop.f32.mrb[0].mxu0
        %548 = vmatprep.mubr.bf16.mxu0 0
        %549 = vmatmul.mubr.bf16.gmra.mrb[0].mxu0 %v394
        %v550 = vpop.f32.mrb[0].mxu0
        %v551 = vadd.f32 %v322, %v550
        %v552 = vpop.f32.mrb[0].mxu0
        %v553 = vpop.f32.mrb[0].mxu0
        %v554 = vadd.f32 %v322, %v553
        %v555 = vpop.f32.mrb[0].mxu0
        %556 = vmatprep.mubr.bf16.mxu0 0
        %557 = vmatmul.mubr.bf16.gmra.mrb[0].mxu0 %v395
        %v558 = vpop.f32.mrb[0].mxu0
        %v559 = vadd.f32 %v322, %v558
        %v560 = vpop.f32.mrb[0].mxu0
        %v561 = vpop.f32.mrb[0].mxu0
        %v562 = vadd.f32 %v322, %v561
        %v563 = vpop.f32.mrb[0].mxu0
        %564 = vmatprep.mubr.bf16.mxu0 0
        %565 = vmatmul.mubr.bf16.gmra.mrb[0].mxu0 %v396
        %v566 = vpop.f32.mrb[0].mxu0
        %v567 = vadd.f32 %v322, %v566
        %v568 = vpop.f32.mrb[0].mxu0
        %v569 = vpop.f32.mrb[0].mxu0
        %v570 = vadd.f32 %v322, %v569
        %v571 = vpop.f32.mrb[0].mxu0
        %572 = vmatprep.mubr.bf16.mxu0 0
        %573 = vmatmul.mubr.bf16.gmra.mrb[0].mxu0 %v397
        %v574 = vpop.f32.mrb[0].mxu0
        %v575 = vadd.f32 %v322, %v574
        %v576 = vpop.f32.mrb[0].mxu0
        %v577 = vpop.f32.mrb[0].mxu0
        %v578 = vadd.f32 %v322, %v577
        %v579 = vpop.f32.mrb[0].mxu0
        %580 = vmatprep.mubr.bf16.mxu0 0
        %581 = vmatmul.mubr.bf16.gmra.mrb[0].mxu0 %v398
        %v582 = vpop.f32.mrb[0].mxu0
        %v583 = vadd.f32 %v322, %v582
        %v584 = vpop.f32.mrb[0].mxu0
        %v585 = vpop.f32.mrb[0].mxu0
        %v586 = vadd.f32 %v322, %v585
        %v587 = vpop.f32.mrb[0].mxu0
        %588 = vmatprep.mubr.bf16.mxu0 0
        %589 = vmatmul.mubr.bf16.gmra.mrb[0].mxu0 %v399
        %v590 = vpop.f32.mrb[0].mxu0
        %v591 = vadd.f32 %v322, %v590
        %v592 = vpop.f32.mrb[0].mxu0
        %v593 = vpop.f32.mrb[0].mxu0
        %v594 = vadd.f32 %v322, %v593
        %v595 = vpop.f32.mrb[0].mxu0
        %596 = vmatprep.mubr.bf16.mxu0 0
        %597 = vmatmul.mubr.bf16.gmra.mrb[0].mxu0 %v400
        %v598 = vpop.f32.mrb[0].mxu0
        %v599 = vadd.f32 %v322, %v598
        %v600 = vpop.f32.mrb[0].mxu0
        %v601 = vpop.f32.mrb[0].mxu0
        %v602 = vadd.f32 %v322, %v601
        %v603 = vpop.f32.mrb[0].mxu0
        %604 = vmatprep.mubr.bf16.mxu0 0
        %605 = vmatmul.mubr.bf16.gmra.mrb[0].mxu0 %v401
        %v606 = vpop.f32.mrb[0].mxu0
        %v607 = vadd.f32 %v322, %v606
        %v608 = vpop.f32.mrb[0].mxu0
        %v609 = vpop.f32.mrb[0].mxu0
        %v610 = vadd.f32 %v322, %v609
        %v611 = vpop.f32.mrb[0].mxu0
        %612 = vmatprep.mubr.bf16.mxu0 0
        %613 = vmatmul.mubr.bf16.gmra.mrb[0].mxu0 %v402
        %v614 = vpop.f32.mrb[0].mxu0
        %v615 = vadd.f32 %v322, %v614
        %v616 = vpop.f32.mrb[0].mxu0
        %v617 = vpop.f32.mrb[0].mxu0
        %v618 = vadd.f32 %v322, %v617
        %v619 = vpop.f32.mrb[0].mxu0
        %620 = vmatprep.mubr.bf16.mxu0 0
        %621 = vmatmul.mubr.bf16.gmra.mrb[0].mxu0 %v403
        %v622 = vpop.f32.mrb[0].mxu0
        %v623 = vadd.f32 %v322, %v622
        %v624 = vpop.f32.mrb[0].mxu0
        %v625 = vpop.f32.mrb[0].mxu0
        %v626 = vadd.f32 %v322, %v625
        %v627 = vpop.f32.mrb[0].mxu0
        %628 = vdwg.mxu0
        %s629 = smul.u32 %s21, 256
        %s630 = scalar_lea.vmem [#allocation2], %s629
        %631 = vst [vmem:[%s630] sm:$0xff] %v503
        %632 = vst [vmem:[%s630 + $0x8] sm:$0xff] %v506
        %633 = vst [vmem:[%s630 + $0x10] sm:$0xff] %v511
        %634 = vst [vmem:[%s630 + $0x18] sm:$0xff] %v514
        %635 = vst [vmem:[%s630 + $0x20] sm:$0xff] %v519
        %636 = vst [vmem:[%s630 + $0x28] sm:$0xff] %v522
        %637 = vst [vmem:[%s630 + $0x30] sm:$0xff] %v527
        %638 = vst [vmem:[%s630 + $0x38] sm:$0xff] %v530
        %639 = vst [vmem:[%s630 + $0x40] sm:$0xff] %v535
        %640 = vst [vmem:[%s630 + $0x48] sm:$0xff] %v538
        %641 = vst [vmem:[%s630 + $0x50] sm:$0xff] %v543
        %642 = vst [vmem:[%s630 + $0x58] sm:$0xff] %v546
        %643 = vst [vmem:[%s630 + $0x60] sm:$0xff] %v551
        %644 = vst [vmem:[%s630 + $0x68] sm:$0xff] %v554
        %645 = vst [vmem:[%s630 + $0x70] sm:$0xff] %v559
        %646 = vst [vmem:[%s630 + $0x78] sm:$0xff] %v562
        %647 = vst [vmem:[%s630 + $0x80] sm:$0xff] %v567
        %648 = vst [vmem:[%s630 + $0x88] sm:$0xff] %v570
        %649 = vst [vmem:[%s630 + $0x90] sm:$0xff] %v575
        %650 = vst [vmem:[%s630 + $0x98] sm:$0xff] %v578
        %651 = vst [vmem:[%s630 + $0xa0] sm:$0xff] %v583
        %652 = vst [vmem:[%s630 + $0xa8] sm:$0xff] %v586
        %653 = vst [vmem:[%s630 + $0xb0] sm:$0xff] %v591
        %654 = vst [vmem:[%s630 + $0xb8] sm:$0xff] %v594
        %655 = vst [vmem:[%s630 + $0xc0] sm:$0xff] %v599
        %656 = vst [vmem:[%s630 + $0xc8] sm:$0xff] %v602
        %657 = vst [vmem:[%s630 + $0xd0] sm:$0xff] %v607
        %658 = vst [vmem:[%s630 + $0xd8] sm:$0xff] %v610
        %659 = vst [vmem:[%s630 + $0xe0] sm:$0xff] %v615
        %660 = vst [vmem:[%s630 + $0xe8] sm:$0xff] %v618
        %661 = vst [vmem:[%s630 + $0xf0] sm:$0xff] %v623
        %662 = vst [vmem:[%s630 + $0xf8] sm:$0xff] %v626
        %v663 = vld [vmem:[#allocation3] sm:$0x1]
        %v664 = vadd.f32 %v503, %v506
        %v665 = vadd.f32 %v664, %v511
        %v666 = vadd.f32 %v665, %v514
        %v667 = vadd.f32 %v666, %v519
        %v668 = vadd.f32 %v667, %v522
        %v669 = vadd.f32 %v668, %v527
        %v670 = vadd.f32 %v669, %v530
        %v671 = vadd.f32 %v670, %v535
        %v672 = vadd.f32 %v671, %v538
        %v673 = vadd.f32 %v672, %v543
        %v674 = vadd.f32 %v673, %v546
        %v675 = vadd.f32 %v674, %v551
        %v676 = vadd.f32 %v675, %v554
        %v677 = vadd.f32 %v676, %v559
        %v678 = vadd.f32 %v677, %v562
        %v679 = vadd.f32 %v678, %v567
        %v680 = vadd.f32 %v679, %v570
        %v681 = vadd.f32 %v680, %v575
        %v682 = vadd.f32 %v681, %v578
        %v683 = vadd.f32 %v682, %v583
        %v684 = vadd.f32 %v683, %v586
        %v685 = vadd.f32 %v684, %v591
        %v686 = vadd.f32 %v685, %v594
        %v687 = vadd.f32 %v686, %v599
        %v688 = vadd.f32 %v687, %v602
        %v689 = vadd.f32 %v688, %v607
        %v690 = vadd.f32 %v689, %v610
        %v691 = vadd.f32 %v690, %v615
        %v692 = vadd.f32 %v691, %v618
        %v693 = vadd.f32 %v692, %v623
        %v694 = vadd.f32 %v693, %v626
        %v695 = vrot.slane %v694, 4
        %v696 = vadd.f32 %v694, %v695
        %v697 = vrot.slane %v696, 2
        %v698 = vadd.f32 %v696, %v697
        %v699 = vrot.slane %v698, 1
        %v700 = vadd.f32 %v698, %v699
        %v701 = vadd.f32 %v663, %v700
        %702 = vst [vmem:[#allocation3] sm:$0x1] %v701
        %v703 = vld [vmem:[#allocation3 + $0x1] sm:$0x1]
        %v704 = vmul.f32 %v503, %v503
        %v705 = vmul.f32 %v506, %v506
        %v706 = vmul.f32 %v511, %v511
        %v707 = vmul.f32 %v514, %v514
        %v708 = vmul.f32 %v519, %v519
        %v709 = vmul.f32 %v522, %v522
        %v710 = vmul.f32 %v527, %v527
        %v711 = vmul.f32 %v530, %v530
        %v712 = vmul.f32 %v535, %v535
        %v713 = vmul.f32 %v538, %v538
        %v714 = vmul.f32 %v543, %v543
        %v715 = vmul.f32 %v546, %v546
        %v716 = vmul.f32 %v551, %v551
        %v717 = vmul.f32 %v554, %v554
        %v718 = vmul.f32 %v559, %v559
        %v719 = vmul.f32 %v562, %v562
        %v720 = vmul.f32 %v567, %v567
        %v721 = vmul.f32 %v570, %v570
        %v722 = vmul.f32 %v575, %v575
        %v723 = vmul.f32 %v578, %v578
        %v724 = vmul.f32 %v583, %v583
        %v725 = vmul.f32 %v586, %v586
        %v726 = vmul.f32 %v591, %v591
        %v727 = vmul.f32 %v594, %v594
        %v728 = vmul.f32 %v599, %v599
        %v729 = vmul.f32 %v602, %v602
        %v730 = vmul.f32 %v607, %v607
        %v731 = vmul.f32 %v610, %v610
        %v732 = vmul.f32 %v615, %v615
        %v733 = vmul.f32 %v618, %v618
        %v734 = vmul.f32 %v623, %v623
        %v735 = vmul.f32 %v626, %v626
        %v736 = vadd.f32 %v704, %v705
        %v737 = vadd.f32 %v736, %v706
        %v738 = vadd.f32 %v737, %v707
        %v739 = vadd.f32 %v738, %v708
        %v740 = vadd.f32 %v739, %v709
        %v741 = vadd.f32 %v740, %v710
        %v742 = vadd.f32 %v741, %v711
        %v743 = vadd.f32 %v742, %v712
        %v744 = vadd.f32 %v743, %v713
        %v745 = vadd.f32 %v744, %v714
        %v746 = vadd.f32 %v745, %v715
        %v747 = vadd.f32 %v746, %v716
        %v748 = vadd.f32 %v747, %v717
        %v749 = vadd.f32 %v748, %v718
        %v750 = vadd.f32 %v749, %v719
        %v751 = vadd.f32 %v750, %v720
        %v752 = vadd.f32 %v751, %v721
        %v753 = vadd.f32 %v752, %v722
        %v754 = vadd.f32 %v753, %v723
        %v755 = vadd.f32 %v754, %v724
        %v756 = vadd.f32 %v755, %v725
        %v757 = vadd.f32 %v756, %v726
        %v758 = vadd.f32 %v757, %v727
        %v759 = vadd.f32 %v758, %v728
        %v760 = vadd.f32 %v759, %v729
        %v761 = vadd.f32 %v760, %v730
        %v762 = vadd.f32 %v761, %v731
        %v763 = vadd.f32 %v762, %v732
        %v764 = vadd.f32 %v763, %v733
        %v765 = vadd.f32 %v764, %v734
        %v766 = vadd.f32 %v765, %v735
        %v767 = vrot.slane %v766, 4
        %v768 = vadd.f32 %v766, %v767
        %v769 = vrot.slane %v768, 2
        %v770 = vadd.f32 %v768, %v769
        %v771 = vrot.slane %v770, 1
        %v772 = vadd.f32 %v770, %v771
        %v773 = vadd.f32 %v703, %v772
        %774 = vst [vmem:[#allocation3 + $0x1] sm:$0x1] %v773
      $region44: #{conv_block.1} parent=39 // pred_fallthru
        _
      %p775 = scmp.eq.s32.totalorder %s20, 1
      // Predicated region
      $region49: #{conv_block.1} parent=39 // pred_check
        %p776 = pneg %p775
      $region50: #{conv_block.1} parent=39 // pred_check_branch
        %778 = sbr.rel (%p776) target = $region52
      $region51: #{conv_block.1} parent=39 // pred_region
        %p779 = scmp.eq.s32.totalorder %s21, 0
        // Predicated region
        $region53: #{conv_block.1} parent=51 // pred_check
          %p780 = pneg %p779
        $region54: #{conv_block.1} parent=51 // pred_check_branch
          %782 = sbr.rel (%p780) target = $region56
        $region55: #{conv_block.1} parent=51 // pred_region
          %v783 = vld [vmem:[#allocation3] sm:$0x1]
          %v784 = vmul.f32 %v783, 0.001953125
          %v785 = vld [vmem:[#allocation3 + $0x1] sm:$0x1]
          %v786 = vmul.f32 %v785, 0.001953125
          %v787 = vmul.f32 %v784, %v784
          %v788 = vsub.f32 %v786, %v787
          %v789 = vmax.f32 %v788, 0.0
          %v790 = vadd.f32 %v789, 1e-05
          %v791 = vrsqrt.pop %v790
          %v792 = vld [vmem:[%s3] sm:$0x1]
          %v793 = vmul.f32 %v792, %v791
          %v794 = vld [vmem:[%s4] sm:$0x1]
          %v795 = vmul.f32 %v784, %v793
          %v796 = vsub.f32 %v794, %v795
          %797 = vst [vmem:[#allocation3] sm:$0x1] %v793
          %798 = vst [vmem:[#allocation3 + $0x1] sm:$0x1] %v796
        $region56: #{conv_block.1} parent=51 // pred_fallthru
          _
        %s799 = smul.u32 %s21, 256
        %s800 = scalar_lea.vmem [#allocation2], %s799
        %v801 = vld [vmem:[%s800] sm:$0xff]
        %v802 = vld [vmem:[%s800 + $0x8] sm:$0xff]
        %v803 = vld [vmem:[%s800 + $0x10] sm:$0xff]
        %v804 = vld [vmem:[%s800 + $0x18] sm:$0xff]
        %v805 = vld [vmem:[%s800 + $0x20] sm:$0xff]
        %v806 = vld [vmem:[%s800 + $0x28] sm:$0xff]
        %v807 = vld [vmem:[%s800 + $0x30] sm:$0xff]
        %v808 = vld [vmem:[%s800 + $0x38] sm:$0xff]
        %v809 = vld [vmem:[%s800 + $0x40] sm:$0xff]
        %v810 = vld [vmem:[%s800 + $0x48] sm:$0xff]
        %v811 = vld [vmem:[%s800 + $0x50] sm:$0xff]
        %v812 = vld [vmem:[%s800 + $0x58] sm:$0xff]
        %v813 = vld [vmem:[%s800 + $0x60] sm:$0xff]
        %v814 = vld [vmem:[%s800 + $0x68] sm:$0xff]
        %v815 = vld [vmem:[%s800 + $0x70] sm:$0xff]
        %v816 = vld [vmem:[%s800 + $0x78] sm:$0xff]
        %v817 = vld [vmem:[%s800 + $0x80] sm:$0xff]
        %v818 = vld [vmem:[%s800 + $0x88] sm:$0xff]
        %v819 = vld [vmem:[%s800 + $0x90] sm:$0xff]
        %v820 = vld [vmem:[%s800 + $0x98] sm:$0xff]
        %v821 = vld [vmem:[%s800 + $0xa0] sm:$0xff]
        %v822 = vld [vmem:[%s800 + $0xa8] sm:$0xff]
        %v823 = vld [vmem:[%s800 + $0xb0] sm:$0xff]
        %v824 = vld [vmem:[%s800 + $0xb8] sm:$0xff]
        %v825 = vld [vmem:[%s800 + $0xc0] sm:$0xff]
        %v826 = vld [vmem:[%s800 + $0xc8] sm:$0xff]
        %v827 = vld [vmem:[%s800 + $0xd0] sm:$0xff]
        %v828 = vld [vmem:[%s800 + $0xd8] sm:$0xff]
        %v829 = vld [vmem:[%s800 + $0xe0] sm:$0xff]
        %v830 = vld [vmem:[%s800 + $0xe8] sm:$0xff]
        %v831 = vld [vmem:[%s800 + $0xf0] sm:$0xff]
        %v832 = vld [vmem:[%s800 + $0xf8] sm:$0xff]
        %v833 = vld [vmem:[#allocation3] sm:$0x1]
        %v834 = vlaneseq
        %v835 = vshrl.u32 %v834, 7
        %v836 = vsub.s32 0, %v835
        %v837 = vrot.slane %v833, %v836
        %v838 = vmul.f32 %v801, %v837
        %v839 = vmul.f32 %v802, %v837
        %v840 = vmul.f32 %v803, %v837
        %v841 = vmul.f32 %v804, %v837
        %v842 = vmul.f32 %v805, %v837
        %v843 = vmul.f32 %v806, %v837
        %v844 = vmul.f32 %v807, %v837
        %v845 = vmul.f32 %v808, %v837
        %v846 = vmul.f32 %v809, %v837
        %v847 = vmul.f32 %v810, %v837
        %v848 = vmul.f32 %v811, %v837
        %v849 = vmul.f32 %v812, %v837
        %v850 = vmul.f32 %v813, %v837
        %v851 = vmul.f32 %v814, %v837
        %v852 = vmul.f32 %v815, %v837
        %v853 = vmul.f32 %v816, %v837
        %v854 = vmul.f32 %v817, %v837
        %v855 = vmul.f32 %v818, %v837
        %v856 = vmul.f32 %v819, %v837
        %v857 = vmul.f32 %v820, %v837
        %v858 = vmul.f32 %v821, %v837
        %v859 = vmul.f32 %v822, %v837
        %v860 = vmul.f32 %v823, %v837
        %v861 = vmul.f32 %v824, %v837
        %v862 = vmul.f32 %v825, %v837
        %v863 = vmul.f32 %v826, %v837
        %v864 = vmul.f32 %v827, %v837
        %v865 = vmul.f32 %v828, %v837
        %v866 = vmul.f32 %v829, %v837
        %v867 = vmul.f32 %v830, %v837
        %v868 = vmul.f32 %v831, %v837
        %v869 = vmul.f32 %v832, %v837
        %v870 = vld [vmem:[#allocation3 + $0x1] sm:$0x1]
        %v871 = vlaneseq
        %v872 = vshrl.u32 %v871, 7
        %v873 = vsub.s32 0, %v872
        %v874 = vrot.slane %v870, %v873
        %v875 = vadd.f32 %v838, %v874
        %v876 = vadd.f32 %v839, %v874
        %v877 = vadd.f32 %v840, %v874
        %v878 = vadd.f32 %v841, %v874
        %v879 = vadd.f32 %v842, %v874
        %v880 = vadd.f32 %v843, %v874
        %v881 = vadd.f32 %v844, %v874
        %v882 = vadd.f32 %v845, %v874
        %v883 = vadd.f32 %v846, %v874
        %v884 = vadd.f32 %v847, %v874
        %v885 = vadd.f32 %v848, %v874
        %v886 = vadd.f32 %v849, %v874
        %v887 = vadd.f32 %v850, %v874
        %v888 = vadd.f32 %v851, %v874
        %v889 = vadd.f32 %v852, %v874
        %v890 = vadd.f32 %v853, %v874
        %v891 = vadd.f32 %v854, %v874
        %v892 = vadd.f32 %v855, %v874
        %v893 = vadd.f32 %v856, %v874
        %v894 = vadd.f32 %v857, %v874
        %v895 = vadd.f32 %v858, %v874
        %v896 = vadd.f32 %v859, %v874
        %v897 = vadd.f32 %v860, %v874
        %v898 = vadd.f32 %v861, %v874
        %v899 = vadd.f32 %v862, %v874
        %v900 = vadd.f32 %v863, %v874
        %v901 = vadd.f32 %v864, %v874
        %v902 = vadd.f32 %v865, %v874
        %v903 = vadd.f32 %v866, %v874
        %v904 = vadd.f32 %v867, %v874
        %v905 = vadd.f32 %v868, %v874
        %v906 = vadd.f32 %v869, %v874
        %v907 = vmax.f32 %v875, 0.0
        %v908 = vmax.f32 %v876, 0.0
        %v909 = vmax.f32 %v877, 0.0
        %v910 = vmax.f32 %v878, 0.0
        %v911 = vmax.f32 %v879, 0.0
        %v912 = vmax.f32 %v880, 0.0
        %v913 = vmax.f32 %v881, 0.0
        %v914 = vmax.f32 %v882, 0.0
        %v915 = vmax.f32 %v883, 0.0
        %v916 = vmax.f32 %v884, 0.0
        %v917 = vmax.f32 %v885, 0.0
        %v918 = vmax.f32 %v886, 0.0
        %v919 = vmax.f32 %v887, 0.0
        %v920 = vmax.f32 %v888, 0.0
        %v921 = vmax.f32 %v889, 0.0
        %v922 = vmax.f32 %v890, 0.0
        %v923 = vmax.f32 %v891, 0.0
        %v924 = vmax.f32 %v892, 0.0
        %v925 = vmax.f32 %v893, 0.0
        %v926 = vmax.f32 %v894, 0.0
        %v927 = vmax.f32 %v895, 0.0
        %v928 = vmax.f32 %v896, 0.0
        %v929 = vmax.f32 %v897, 0.0
        %v930 = vmax.f32 %v898, 0.0
        %v931 = vmax.f32 %v899, 0.0
        %v932 = vmax.f32 %v900, 0.0
        %v933 = vmax.f32 %v901, 0.0
        %v934 = vmax.f32 %v902, 0.0
        %v935 = vmax.f32 %v903, 0.0
        %v936 = vmax.f32 %v904, 0.0
        %v937 = vmax.f32 %v905, 0.0
        %v938 = vmax.f32 %v906, 0.0
        %939 = vst [vmem:[%s256] sm:$0xff] %v907
        %940 = vst [vmem:[%s256 + $0x8] sm:$0xff] %v908
        %941 = vst [vmem:[%s256 + $0x10] sm:$0xff] %v909
        %942 = vst [vmem:[%s256 + $0x18] sm:$0xff] %v910
        %943 = vst [vmem:[%s256 + $0x20] sm:$0xff] %v911
        %944 = vst [vmem:[%s256 + $0x28] sm:$0xff] %v912
        %945 = vst [vmem:[%s256 + $0x30] sm:$0xff] %v913
        %946 = vst [vmem:[%s256 + $0x38] sm:$0xff] %v914
        %947 = vst [vmem:[%s256 + $0x40] sm:$0xff] %v915
        %948 = vst [vmem:[%s256 + $0x48] sm:$0xff] %v916
        %949 = vst [vmem:[%s256 + $0x50] sm:$0xff] %v917
        %950 = vst [vmem:[%s256 + $0x58] sm:$0xff] %v918
        %951 = vst [vmem:[%s256 + $0x60] sm:$0xff] %v919
        %952 = vst [vmem:[%s256 + $0x68] sm:$0xff] %v920
        %953 = vst [vmem:[%s256 + $0x70] sm:$0xff] %v921
        %954 = vst [vmem:[%s256 + $0x78] sm:$0xff] %v922
        %955 = vst [vmem:[%s256 + $0x80] sm:$0xff] %v923
        %956 = vst [vmem:[%s256 + $0x88] sm:$0xff] %v924
        %957 = vst [vmem:[%s256 + $0x90] sm:$0xff] %v925
        %958 = vst [vmem:[%s256 + $0x98] sm:$0xff] %v926
        %959 = vst [vmem:[%s256 + $0xa0] sm:$0xff] %v927
        %960 = vst [vmem:[%s256 + $0xa8] sm:$0xff] %v928
        %961 = vst [vmem:[%s256 + $0xb0] sm:$0xff] %v929
        %962 = vst [vmem:[%s256 + $0xb8] sm:$0xff] %v930
        %963 = vst [vmem:[%s256 + $0xc0] sm:$0xff] %v931
        %964 = vst [vmem:[%s256 + $0xc8] sm:$0xff] %v932
        %965 = vst [vmem:[%s256 + $0xd0] sm:$0xff] %v933
        %966 = vst [vmem:[%s256 + $0xd8] sm:$0xff] %v934
        %967 = vst [vmem:[%s256 + $0xe0] sm:$0xff] %v935
        %968 = vst [vmem:[%s256 + $0xe8] sm:$0xff] %v936
        %969 = vst [vmem:[%s256 + $0xf0] sm:$0xff] %v937
        %970 = vst [vmem:[%s256 + $0xf8] sm:$0xff] %v938
      $region52: #{conv_block.1} parent=39 // pred_fallthru
        _
      %s971 = smul.u32 %s21, %s20
      %s972 = smul.u32 32, %s971
      %p973 = scmp.lt.s32.totalorder %s972, 63
      %s974 = scalar_select %p973, %s972, 63
      %s975 = smul.addr %s974, 8
      %s976 = scalar_lea.vmem %s5, %s975
      // Predicated region
      $region57: #{conv_block.1} parent=39 // pred_check
        %p977 = pneg %p162
      $region58: #{conv_block.1} parent=39 // pred_check_branch
        %979 = sbr.rel (%p977) target = $region60
      $region59: #{conv_block.1} parent=39 // pred_region
        %s980 = smul.u32 %s21, %s20
        %s981 = smul.u32 32, %s980
      $region60: #{conv_block.1} parent=39 // pred_fallthru
        _
    $region40: #{conv_block.1} parent=5 // pred_fallthru
      _
    %p982 = scmp.le.s32.totalorder 2, %s11
    // Predicated region
    $region61: #{conv_block.1} parent=5 // pred_check
      %p983 = pneg %p982
    $region62: #{conv_block.1} parent=5 // pred_check_branch
      %985 = sbr.rel (%p983) target = $region64
    $region63: #{conv_block.1} parent=5 // pred_region
      %s986 = ssub.s32 %s11, 2
      // Predicated region
      $region65: #{conv_block.1} parent=63 // pred_check
        %p987 = pneg %p168
      $region66: #{conv_block.1} parent=63 // pred_check_branch
        %989 = sbr.rel (%p987) target = $region68
      $region67: #{conv_block.1} parent=63 // pred_region
        %s990 = smul.u32 %s23, %s22
        %s991 = smul.u32 32, %s990
        %p992 = scmp.lt.s32.totalorder %s991, 63
        %s993 = scalar_select %p992, %s991, 63
        %s994 = smul.addr %s993, 8
        %s995 = scalar_lea.vmem %s5, %s994
      $region68: #{conv_block.1} parent=63 // pred_fallthru
        _
    $region64: #{conv_block.1} parent=5 // pred_fallthru
      _
  $region6: #{conv_block.1} parent=0 // loop_footer
    %s15 = sadd.s32 1, %s11
  $region7: #{conv_block.1} parent=0 // loop_footer_branch
    %10 = sbr.rel target = $region3
  $region8: #{conv_block.1} parent=0 // loop_exit
    _

</llo_original>
